<compile_context>
chip_gen: v7x
topology: tpu7x:2x2x1
jax: 0.10.0
libtpu: 0.0.40
codegen_flags: <defaults>
</compile_context>

<pallas_src>
import jax
import jax.numpy as jnp
from jax.experimental import pallas as pl
from jax.experimental.pallas import tpu as pltpu


def _round_up(x: int, m: int) -> int:
    return ((x + m - 1) // m) * m


def cvlinear_kernel(xr_ref, xi_ref, wr_ref, wi_ref, ws_ref,
                    or_ref, oi_ref, acc1_ref, acc2_ref, acc3_ref):
    k = pl.program_id(2)

    @pl.when(k == 0)
    def _():
        acc1_ref[...] = jnp.zeros_like(acc1_ref)
        acc2_ref[...] = jnp.zeros_like(acc2_ref)
        acc3_ref[...] = jnp.zeros_like(acc3_ref)

    xr = xr_ref[...]
    xi = xi_ref[...]

    # Gauss' trick: three real matmuls per (i, j, k) block, f32 accumulate.
    acc1_ref[...] += jnp.dot(xr, wr_ref[...], preferred_element_type=jnp.float32)
    acc2_ref[...] += jnp.dot(xi, wi_ref[...], preferred_element_type=jnp.float32)
    acc3_ref[...] += jnp.dot(xr + xi, ws_ref[...],
                             preferred_element_type=jnp.float32)

    @pl.when(k == pl.num_programs(2) - 1)
    def _():
        t1 = acc1_ref[...]
        t2 = acc2_ref[...]
        t3 = acc3_ref[...]
        or_ref[...] = (t1 - t2).astype(or_ref.dtype)
        oi_ref[...] = (t3 - t2 - t1).astype(oi_ref.dtype)


def cvlinear(x_real, x_imag, w_real, w_imag, *,
             tile_b=256, tile_n=512, tile_k=512,
             compute_dtype=jnp.float32):
    """Complex-valued linear layer forward (bias=False).

    x_real, x_imag : (B, in_features) float32
    w_real, w_imag : (out_features, in_features) float32  (PyTorch layout)
    compute_dtype  : jnp.float32 (exact) or jnp.bfloat16 (faster MXU on
                     v6e/v7x, still f32-accumulated).
    returns (out_real, out_imag), each (B, out_features) float32
    """
    B, K = x_real.shape
    N, K2 = w_real.shape
    assert K == K2, "weight / input feature mismatch"

    # Clamp tiles to the (padded) problem while honoring the (8, 128) layout
    # rule: sublane dims multiples of 8, lane dims multiples of 128.
    tile_b = min(tile_b, _round_up(B, 8))
    tile_n = min(tile_n, _round_up(N, 128))
    tile_k = min(tile_k, _round_up(K, 128))

    Bp = _round_up(B, tile_b)
    Np = _round_up(N, tile_n)
    Kp = _round_up(K, tile_k)

    # Hoist the weight sum and the transposes out of the hot path (one-time
    # wrapper pass; the i-invariant index_map keeps the weight DMAs streaming).
    wr_t = w_real.T                 # (K, N)
    wi_t = w_imag.T                 # (K, N)
    ws_t = (w_real + w_imag).T      # (K, N)

    def pad2(a, rows, cols):
        pr, pc = rows - a.shape[0], cols - a.shape[1]
        if pr or pc:
            a = jnp.pad(a, ((0, pr), (0, pc)))
        return a

    xr = pad2(x_real, Bp, Kp).astype(compute_dtype)
    xi = pad2(x_imag, Bp, Kp).astype(compute_dtype)
    wr_t = pad2(wr_t, Kp, Np).astype(compute_dtype)
    wi_t = pad2(wi_t, Kp, Np).astype(compute_dtype)
    ws_t = pad2(ws_t, Kp, Np).astype(compute_dtype)

    grid = (Bp // tile_b, Np // tile_n, Kp // tile_k)

    x_spec = pl.BlockSpec((tile_b, tile_k), lambda i, j, k: (i, k))
    w_spec = pl.BlockSpec((tile_k, tile_n), lambda i, j, k: (k, j))
    o_spec = pl.BlockSpec((tile_b, tile_n), lambda i, j, k: (i, j))

    cost = pl.CostEstimate(
        flops=3 * 2 * Bp * Kp * Np,
        transcendentals=0,
        bytes_accessed=(2 * Bp * Kp + 3 * Kp * Np + 2 * Bp * Np) * 4,
    )

    out_r, out_i = pl.pallas_call(
        cvlinear_kernel,
        out_shape=(
            jax.ShapeDtypeStruct((Bp, Np), jnp.float32),
            jax.ShapeDtypeStruct((Bp, Np), jnp.float32),
        ),
        grid_spec=pltpu.PrefetchScalarGridSpec(
            num_scalar_prefetch=0,
            grid=grid,
            in_specs=[x_spec, x_spec, w_spec, w_spec, w_spec],
            out_specs=[o_spec, o_spec],
            scratch_shapes=[
                pltpu.VMEM((tile_b, tile_n), jnp.float32),
                pltpu.VMEM((tile_b, tile_n), jnp.float32),
                pltpu.VMEM((tile_b, tile_n), jnp.float32),
            ],
        ),
        compiler_params=pltpu.CompilerParams(
            # batch / out-features parallel (megacore), reduction last.
            dimension_semantics=("parallel", "parallel", "arbitrary"),
        ),
        cost_estimate=cost,
    )(xr, xi, wr_t, wi_t, ws_t)

    return out_r[:B, :N], out_i[:B, :N]


if __name__ == "__main__":
    # Small shapes consistent with nn.Linear(in_features, out_features, bias=False)
    B = 16
    IN_FEATURES = 32
    OUT_FEATURES = 32

    key = jax.random.PRNGKey(0)
    k_xr, k_xi, k_wr, k_wi = jax.random.split(key, 4)

    # PyTorch weight layout (out, in), default-style uniform init scale.
    bound = 1.0 / (IN_FEATURES ** 0.5)
    w_real = jax.random.uniform(k_wr, (OUT_FEATURES, IN_FEATURES),
                                jnp.float32, -bound, bound)
    w_imag = jax.random.uniform(k_wi, (OUT_FEATURES, IN_FEATURES),
                                jnp.float32, -bound, bound)

    x_real = jax.random.normal(k_xr, (B, IN_FEATURES), jnp.float32)
    x_imag = jax.random.normal(k_xi, (B, IN_FEATURES), jnp.float32)

    out_r, out_i = cvlinear(x_real, x_imag, w_real, w_imag)
    jax.block_until_ready((out_r, out_i))

    # Pure-JAX reference (naive complex matmul).
    ref_r = x_real @ w_real.T - x_imag @ w_imag.T
    ref_i = x_real @ w_imag.T + x_imag @ w_real.T

    assert out_r.shape == (B, OUT_FEATURES) and out_i.shape == (B, OUT_FEATURES)
    assert jnp.allclose(out_r, ref_r, atol=1e-5, rtol=1e-5)
    assert jnp.allclose(out_i, ref_i, atol=1e-5, rtol=1e-5)

    print("KERNEL_OK")
</pallas_src>

<mosaic_0001>
module attributes {stable_mosaic.version = 11 : i64} {
  func.func @cvlinear_kernel(%arg0: i32, %arg1: i32, %arg2: i32, %arg3: memref<16x128xf32, #tpu.memory_space<vmem>>, %arg4: memref<16x128xf32, #tpu.memory_space<vmem>>, %arg5: memref<128x128xf32, #tpu.memory_space<vmem>>, %arg6: memref<128x128xf32, #tpu.memory_space<vmem>>, %arg7: memref<128x128xf32, #tpu.memory_space<vmem>>, %arg8: memref<16x128xf32, #tpu.memory_space<vmem>>, %arg9: memref<16x128xf32, #tpu.memory_space<vmem>>, %arg10: memref<16x128xf32, #tpu.memory_space<vmem>>, %arg11: memref<16x128xf32, #tpu.memory_space<vmem>>, %arg12: memref<16x128xf32, #tpu.memory_space<vmem>>) attributes {dimension_semantics = [#tpu.dimension_semantics<parallel>, #tpu.dimension_semantics<parallel>, #tpu.dimension_semantics<arbitrary>], iteration_bounds = array<i64: 1, 1, 1>, scalar_prefetch = 0 : i64, scratch_operands = 3 : i64, tpu.core_type = #tpu.core_type<tc>, window_params = [{transform_indices = @transform_0, window_bounds = array<i64: 16, 128>}, {transform_indices = @transform_1, window_bounds = array<i64: 16, 128>}, {transform_indices = @transform_2, window_bounds = array<i64: 128, 128>}, {transform_indices = @transform_3, window_bounds = array<i64: 128, 128>}, {transform_indices = @transform_4, window_bounds = array<i64: 128, 128>}, {transform_indices = @transform_5, window_bounds = array<i64: 16, 128>}, {transform_indices = @transform_6, window_bounds = array<i64: 16, 128>}]} {
    %c0_i32 = arith.constant 0 : i32
    %0 = arith.cmpi eq, %arg2, %c0_i32 : i32
    %1 = arith.extui %0 : i1 to i32
    %c0_i32_0 = arith.constant 0 : i32
    %2 = arith.cmpi ne, %1, %c0_i32_0 : i32
    scf.if %2 {
      %cst_26 = arith.constant 0.000000e+00 : f32
      %24 = vector.broadcast %cst_26 : f32 to vector<16x128xf32>
      %c0_27 = arith.constant 0 : index
      %c0_28 = arith.constant 0 : index
      %25 = vector.load %arg10[%c0_27, %c0_28] : memref<16x128xf32, #tpu.memory_space<vmem>>, vector<16x128xf32>
      tpu.vector_store %arg10[%c0_27, %c0_28], %24 {strides = array<i32>} : memref<16x128xf32, #tpu.memory_space<vmem>>, vector<16x128xf32>,
      %cst_29 = arith.constant 0.000000e+00 : f32
      %26 = vector.broadcast %cst_29 : f32 to vector<16x128xf32>
      %c0_30 = arith.constant 0 : index
      %c0_31 = arith.constant 0 : index
      %27 = vector.load %arg11[%c0_30, %c0_31] : memref<16x128xf32, #tpu.memory_space<vmem>>, vector<16x128xf32>
      tpu.vector_store %arg11[%c0_30, %c0_31], %26 {strides = array<i32>} : memref<16x128xf32, #tpu.memory_space<vmem>>, vector<16x128xf32>,
      %cst_32 = arith.constant 0.000000e+00 : f32
      %28 = vector.broadcast %cst_32 : f32 to vector<16x128xf32>
      %c0_33 = arith.constant 0 : index
      %c0_34 = arith.constant 0 : index
      %29 = vector.load %arg12[%c0_33, %c0_34] : memref<16x128xf32, #tpu.memory_space<vmem>>, vector<16x128xf32>
      tpu.vector_store %arg12[%c0_33, %c0_34], %28 {strides = array<i32>} : memref<16x128xf32, #tpu.memory_space<vmem>>, vector<16x128xf32>,
    } else {
    }
    %c0 = arith.constant 0 : index
    %c0_1 = arith.constant 0 : index
    %3 = vector.load %arg3[%c0, %c0_1] : memref<16x128xf32, #tpu.memory_space<vmem>>, vector<16x128xf32>
    %c0_2 = arith.constant 0 : index
    %c0_3 = arith.constant 0 : index
    %4 = vector.load %arg4[%c0_2, %c0_3] : memref<16x128xf32, #tpu.memory_space<vmem>>, vector<16x128xf32>
    %c0_4 = arith.constant 0 : index
    %c0_5 = arith.constant 0 : index
    %5 = vector.load %arg10[%c0_4, %c0_5] : memref<16x128xf32, #tpu.memory_space<vmem>>, vector<16x128xf32>
    %c0_6 = arith.constant 0 : index
    %c0_7 = arith.constant 0 : index
    %6 = vector.load %arg5[%c0_6, %c0_7] : memref<128x128xf32, #tpu.memory_space<vmem>>, vector<128x128xf32>
    %cst = arith.constant dense<0.000000e+00> : vector<16x128xf32>
    %7 = tpu.matmul %3, %6, %cst {dimension_numbers = #tpu.dot_dimension_numbers<[1], [0], [0], [1], [0, 0, 1, 1], [], []>} : vector<16x128xf32>, vector<128x128xf32>, vector<16x128xf32> -> vector<16x128xf32>
    %8 = arith.addf %5, %7 : vector<16x128xf32>
    %c0_8 = arith.constant 0 : index
    %c0_9 = arith.constant 0 : index
    %9 = vector.load %arg10[%c0_8, %c0_9] : memref<16x128xf32, #tpu.memory_space<vmem>>, vector<16x128xf32>
    tpu.vector_store %arg10[%c0_8, %c0_9], %8 {strides = array<i32>} : memref<16x128xf32, #tpu.memory_space<vmem>>, vector<16x128xf32>,
    %c0_10 = arith.constant 0 : index
    %c0_11 = arith.constant 0 : index
    %10 = vector.load %arg11[%c0_10, %c0_11] : memref<16x128xf32, #tpu.memory_space<vmem>>, vector<16x128xf32>
    %c0_12 = arith.constant 0 : index
    %c0_13 = arith.constant 0 : index
    %11 = vector.load %arg6[%c0_12, %c0_13] : memref<128x128xf32, #tpu.memory_space<vmem>>, vector<128x128xf32>
    %cst_14 = arith.constant dense<0.000000e+00> : vector<16x128xf32>
    %12 = tpu.matmul %4, %11, %cst_14 {dimension_numbers = #tpu.dot_dimension_numbers<[1], [0], [0], [1], [0, 0, 1, 1], [], []>} : vector<16x128xf32>, vector<128x128xf32>, vector<16x128xf32> -> vector<16x128xf32>
    %13 = arith.addf %10, %12 : vector<16x128xf32>
    %c0_15 = arith.constant 0 : index
    %c0_16 = arith.constant 0 : index
    %14 = vector.load %arg11[%c0_15, %c0_16] : memref<16x128xf32, #tpu.memory_space<vmem>>, vector<16x128xf32>
    tpu.vector_store %arg11[%c0_15, %c0_16], %13 {strides = array<i32>} : memref<16x128xf32, #tpu.memory_space<vmem>>, vector<16x128xf32>,
    %c0_17 = arith.constant 0 : index
    %c0_18 = arith.constant 0 : index
    %15 = vector.load %arg12[%c0_17, %c0_18] : memref<16x128xf32, #tpu.memory_space<vmem>>, vector<16x128xf32>
    %16 = arith.addf %3, %4 : vector<16x128xf32>
    %c0_19 = arith.constant 0 : index
    %c0_20 = arith.constant 0 : index
    %17 = vector.load %arg7[%c0_19, %c0_20] : memref<128x128xf32, #tpu.memory_space<vmem>>, vector<128x128xf32>
    %cst_21 = arith.constant dense<0.000000e+00> : vector<16x128xf32>
    %18 = tpu.matmul %16, %17, %cst_21 {dimension_numbers = #tpu.dot_dimension_numbers<[1], [0], [0], [1], [0, 0, 1, 1], [], []>} : vector<16x128xf32>, vector<128x128xf32>, vector<16x128xf32> -> vector<16x128xf32>
    %19 = arith.addf %15, %18 : vector<16x128xf32>
    %c0_22 = arith.constant 0 : index
    %c0_23 = arith.constant 0 : index
    %20 = vector.load %arg12[%c0_22, %c0_23] : memref<16x128xf32, #tpu.memory_space<vmem>>, vector<16x128xf32>
    tpu.vector_store %arg12[%c0_22, %c0_23], %19 {strides = array<i32>} : memref<16x128xf32, #tpu.memory_space<vmem>>, vector<16x128xf32>,
    %c0_i32_24 = arith.constant 0 : i32
    %21 = arith.cmpi eq, %arg2, %c0_i32_24 : i32
    %22 = arith.extui %21 : i1 to i32
    %c0_i32_25 = arith.constant 0 : i32
    %23 = arith.cmpi ne, %22, %c0_i32_25 : i32
    scf.if %23 {
      %c0_26 = arith.constant 0 : index
      %c0_27 = arith.constant 0 : index
      %24 = vector.load %arg10[%c0_26, %c0_27] : memref<16x128xf32, #tpu.memory_space<vmem>>, vector<16x128xf32>
      %c0_28 = arith.constant 0 : index
      %c0_29 = arith.constant 0 : index
      %25 = vector.load %arg11[%c0_28, %c0_29] : memref<16x128xf32, #tpu.memory_space<vmem>>, vector<16x128xf32>
      %c0_30 = arith.constant 0 : index
      %c0_31 = arith.constant 0 : index
      %26 = vector.load %arg12[%c0_30, %c0_31] : memref<16x128xf32, #tpu.memory_space<vmem>>, vector<16x128xf32>
      %27 = arith.subf %24, %25 : vector<16x128xf32>
      %c0_32 = arith.constant 0 : index
      %c0_33 = arith.constant 0 : index
      %28 = vector.load %arg8[%c0_32, %c0_33] : memref<16x128xf32, #tpu.memory_space<vmem>>, vector<16x128xf32>
      tpu.vector_store %arg8[%c0_32, %c0_33], %27 {strides = array<i32>} : memref<16x128xf32, #tpu.memory_space<vmem>>, vector<16x128xf32>,
      %29 = arith.subf %26, %25 : vector<16x128xf32>
      %30 = arith.subf %29, %24 : vector<16x128xf32>
      %c0_34 = arith.constant 0 : index
      %c0_35 = arith.constant 0 : index
      %31 = vector.load %arg9[%c0_34, %c0_35] : memref<16x128xf32, #tpu.memory_space<vmem>>, vector<16x128xf32>
      tpu.vector_store %arg9[%c0_34, %c0_35], %30 {strides = array<i32>} : memref<16x128xf32, #tpu.memory_space<vmem>>, vector<16x128xf32>,
    } else {
    }
    return
  }
  func.func @transform_0(%arg0: i32, %arg1: i32, %arg2: i32) -> (i32, i32) {
    %c0_i32 = arith.constant 0 : i32
    return %arg0, %arg2 : i32, i32
  }
  func.func @transform_1(%arg0: i32, %arg1: i32, %arg2: i32) -> (i32, i32) {
    %c0_i32 = arith.constant 0 : i32
    return %arg0, %arg2 : i32, i32
  }
  func.func @transform_2(%arg0: i32, %arg1: i32, %arg2: i32) -> (i32, i32) {
    %c0_i32 = arith.constant 0 : i32
    return %arg2, %arg1 : i32, i32
  }
  func.func @transform_3(%arg0: i32, %arg1: i32, %arg2: i32) -> (i32, i32) {
    %c0_i32 = arith.constant 0 : i32
    return %arg2, %arg1 : i32, i32
  }
  func.func @transform_4(%arg0: i32, %arg1: i32, %arg2: i32) -> (i32, i32) {
    %c0_i32 = arith.constant 0 : i32
    return %arg2, %arg1 : i32, i32
  }
  func.func @transform_5(%arg0: i32, %arg1: i32, %arg2: i32) -> (i32, i32) {
    %c0_i32 = arith.constant 0 : i32
    return %arg0, %arg1 : i32, i32
  }
  func.func @transform_6(%arg0: i32, %arg1: i32, %arg2: i32) -> (i32, i32) {
    %c0_i32 = arith.constant 0 : i32
    return %arg0, %arg1 : i32, i32
  }
}

</mosaic_0001>

<llo_original>
// kernel: tpu_custom_call.1
$region0: #{tpu_custom_call.1}
  #allocation0 [shape = 'u32[]', space=smem, size = 0x4, offset = 0x4, fixed_abs, tag = 'smem constant byte address 0x4 - core index']
  #allocation1 [shape = 'u32[144,128]{1,0:T(1,128)}', space=vmem, size = 0x12000, scoped, tag = 'internal scratch']
  #allocation2 [shape = 'f32[16,128]{1,0:T(8,128)}', space=vmem, size = 0x2000, scoped, tag = 'scratch operand']
  #allocation3 [shape = 'f32[16,128]{1,0:T(8,128)}', space=vmem, size = 0x2000, scoped, tag = 'scratch operand']
  #allocation4 [shape = 'f32[16,128]{1,0:T(8,128)}', space=vmem, size = 0x2000, scoped, tag = 'scratch operand']
  %s0 = inlined_call_operand.hbm [shape: f32[16,128], index: 0, kind: input, shape index: {}]
  %s1 = inlined_call_operand.hbm [shape: f32[16,128], index: 1, kind: input, shape index: {}]
  %s2 = inlined_call_operand.hbm [shape: f32[128,128], index: 2, kind: input, shape index: {}]
  %s3 = inlined_call_operand.hbm [shape: f32[128,128], index: 3, kind: input, shape index: {}]
  %s4 = inlined_call_operand.hbm [shape: f32[128,128], index: 4, kind: input, shape index: {}]
  %s5 = inlined_call_operand.hbm [shape: f32[16,128], index: 5, kind: output, shape index: {0}]
  %s6 = inlined_call_operand.hbm [shape: f32[16,128], index: 6, kind: output, shape index: {1}]
  %7 = xla_tuple %s5, %s6
  %s8 = sld [smem:[#allocation0]]
  $region66: #{tpu_custom_call.1} parent=0
    _
  %s10 = ssub.s32 1, %s8
  %s11 = scalar_select 0, %s10, %s8
  $region1: #{tpu_custom_call.1} parent=0
    #allocation5 [shape = 'u8[8192]{0}', space=vmem, size = 0x2000, scoped, tag = 'input window, operand 0, single buffered']
    #allocation6 [shape = 's32[1]{0}', space=sflag, size = 0x4, scoped, tag = 'scoped memory for tpu_custom_call.1']
    #allocation7 [shape = 's32[1]{0}', space=sflag, size = 0x4, scoped, tag = 'scoped memory for tpu_custom_call.1']
    #allocation8 [shape = 'u8[8192]{0}', space=vmem, size = 0x2000, scoped, tag = 'input window, operand 1, single buffered']
    #allocation9 [shape = 's32[1]{0}', space=sflag, size = 0x4, scoped, tag = 'scoped memory for tpu_custom_call.1']
    #allocation10 [shape = 'u8[65536]{0}', space=vmem, size = 0x10000, scoped, tag = 'input window, operand 2, single buffered']
    #allocation11 [shape = 'u8[65536]{0}', space=vmem, size = 0x10000, scoped, tag = 'input window, operand 3, single buffered']
    #allocation12 [shape = 's32[1]{0}', space=sflag, size = 0x4, scoped, tag = 'scoped memory for tpu_custom_call.1']
    #allocation13 [shape = 'u8[65536]{0}', space=vmem, size = 0x10000, scoped, tag = 'input window, operand 4, single buffered']
    #allocation14 [shape = 'u8[8192]{0}', space=vmem, size = 0x2000, scoped, tag = 'output window, operand 0, single buffered']
    #allocation15 [shape = 'u8[8192]{0}', space=vmem, size = 0x2000, scoped, tag = 'output window, operand 1, single buffered']
    #allocation16 [shape = 's32[1]{0}', space=sflag, size = 0x4, scoped, tag = 'scoped memory for tpu_custom_call.1']
    %12 = vsyncpa [#allocation6], 0
    %13 = vsyncpa [#allocation9], 0
    %14 = vsyncpa [#allocation12], 0
    %15 = vsyncpa [#allocation7], 0
    %16 = vsyncpa [#allocation16], 0
    // Predicated region
    $region2: #{tpu_custom_call.1} parent=1 // pred_check
      _
    $region3: #{tpu_custom_call.1} parent=1 // pred_check_branch
      %18 = sbr.rel (0) target = $region5
    $region4: #{tpu_custom_call.1} parent=1 // pred_region
      %s20 = ssub.s32 256, 256
      %21 = vsyncadd [#allocation6], %s20
      %s22 = sshll.u32 [#allocation5], 4
      %s23 = int_to_ptr.vmem [resolvable:$true] %s22
      %28 = dma.hbm_to_vmem [thread:$0]  %s0, 256, %s23, [#allocation6], 128, 128, 8
    $region5: #{tpu_custom_call.1} parent=1 // pred_fallthru
      _
    // Predicated region
    $region6: #{tpu_custom_call.1} parent=1 // pred_check
      _
    $region7: #{tpu_custom_call.1} parent=1 // pred_check_branch
      %30 = sbr.rel (0) target = $region9
    $region8: #{tpu_custom_call.1} parent=1 // pred_region
      %s32 = ssub.s32 256, 256
      %33 = vsyncadd [#allocation9], %s32
      %s34 = sshll.u32 [#allocation8], 4
      %s35 = int_to_ptr.vmem [resolvable:$true] %s34
      %40 = dma.hbm_to_vmem [thread:$0]  %s1, 256, %s35, [#allocation9], 128, 128, 8
    $region9: #{tpu_custom_call.1} parent=1 // pred_fallthru
      _
    // Predicated region
    $region10: #{tpu_custom_call.1} parent=1 // pred_check
      _
    $region11: #{tpu_custom_call.1} parent=1 // pred_check_branch
      %42 = sbr.rel (0) target = $region13
    $region12: #{tpu_custom_call.1} parent=1 // pred_region
      %s44 = ssub.s32 2048, 2048
      %45 = vsyncadd [#allocation9], %s44
      %s46 = sshll.u32 [#allocation10], 4
      %s47 = int_to_ptr.vmem [resolvable:$true] %s46
      %52 = dma.hbm_to_vmem [thread:$0]  %s2, 2048, %s47, [#allocation9], 128, 128, 8
    $region13: #{tpu_custom_call.1} parent=1 // pred_fallthru
      _
    // Predicated region
    $region14: #{tpu_custom_call.1} parent=1 // pred_check
      _
    $region15: #{tpu_custom_call.1} parent=1 // pred_check_branch
      %54 = sbr.rel (0) target = $region17
    $region16: #{tpu_custom_call.1} parent=1 // pred_region
      %s56 = ssub.s32 2048, 2048
      %57 = vsyncadd [#allocation12], %s56
      %s58 = sshll.u32 [#allocation11], 4
      %s59 = int_to_ptr.vmem [resolvable:$true] %s58
      %64 = dma.hbm_to_vmem [thread:$0]  %s3, 2048, %s59, [#allocation12], 128, 128, 8
    $region17: #{tpu_custom_call.1} parent=1 // pred_fallthru
      _
    // Predicated region
    $region18: #{tpu_custom_call.1} parent=1 // pred_check
      _
    $region19: #{tpu_custom_call.1} parent=1 // pred_check_branch
      %66 = sbr.rel (0) target = $region21
    $region20: #{tpu_custom_call.1} parent=1 // pred_region
      %s68 = ssub.s32 2048, 2048
      %69 = vsyncadd [#allocation12], %s68
      %s70 = sshll.u32 [#allocation13], 4
      %s71 = int_to_ptr.vmem [resolvable:$true] %s70
      %76 = dma.hbm_to_vmem [thread:$0]  %s4, 2048, %s71, [#allocation12], 128, 128, 8
    $region21: #{tpu_custom_call.1} parent=1 // pred_fallthru
      _
    // Predicated region
    $region22: #{tpu_custom_call.1} parent=1 // pred_check
      _
    $region23: #{tpu_custom_call.1} parent=1 // pred_check_branch
      %78 = sbr.rel (0) target = $region25
    $region24: #{tpu_custom_call.1} parent=1 // pred_region
      %79 = dma.done [#allocation6], 256
    $region25: #{tpu_custom_call.1} parent=1 // pred_fallthru
      _
    // Predicated region
    $region26: #{tpu_custom_call.1} parent=1 // pred_check
      _
    $region27: #{tpu_custom_call.1} parent=1 // pred_check_branch
      %81 = sbr.rel (0) target = $region29
    $region28: #{tpu_custom_call.1} parent=1 // pred_region
      %82 = dma.done [#allocation9], 256
    $region29: #{tpu_custom_call.1} parent=1 // pred_fallthru
      _
    // Predicated region
    $region30: #{tpu_custom_call.1} parent=1 // pred_check
      _
    $region31: #{tpu_custom_call.1} parent=1 // pred_check_branch
      %84 = sbr.rel (0) target = $region33
    $region32: #{tpu_custom_call.1} parent=1 // pred_region
      %85 = dma.done [#allocation9], 2048
    $region33: #{tpu_custom_call.1} parent=1 // pred_fallthru
      _
    // Predicated region
    $region34: #{tpu_custom_call.1} parent=1 // pred_check
      _
    $region35: #{tpu_custom_call.1} parent=1 // pred_check_branch
      %87 = sbr.rel (0) target = $region37
    $region36: #{tpu_custom_call.1} parent=1 // pred_region
      %88 = dma.done [#allocation12], 2048
    $region37: #{tpu_custom_call.1} parent=1 // pred_fallthru
      _
    // Predicated region
    $region38: #{tpu_custom_call.1} parent=1 // pred_check
      _
    $region39: #{tpu_custom_call.1} parent=1 // pred_check_branch
      %90 = sbr.rel (0) target = $region41
    $region40: #{tpu_custom_call.1} parent=1 // pred_region
      %91 = dma.done [#allocation12], 2048
    $region41: #{tpu_custom_call.1} parent=1 // pred_fallthru
      _
    %p92 = scmp.eq.s32.totalorder 0, 0
    // Predicated region
    $region42: #{tpu_custom_call.1} parent=1 // pred_check
      %p93 = pneg %p92
    $region43: #{tpu_custom_call.1} parent=1 // pred_check_branch
      %95 = sbr.rel (%p93) target = $region45
    $region44: #{tpu_custom_call.1} parent=1 // pred_region
      %96 = vst [vmem:[#allocation2] sm:$0xff] 0.0
      %97 = vst [vmem:[#allocation2 + $0x8] sm:$0xff] 0.0
      %98 = vst [vmem:[#allocation3] sm:$0xff] 0.0
      %99 = vst [vmem:[#allocation3 + $0x8] sm:$0xff] 0.0
      %100 = vst [vmem:[#allocation4] sm:$0xff] 0.0
      %101 = vst [vmem:[#allocation4 + $0x8] sm:$0xff] 0.0
    $region45: #{tpu_custom_call.1} parent=1 // pred_fallthru
      _
    %v102 = vld [vmem:[#allocation5] sm:$0xff]
    %v103 = vld [vmem:[#allocation5 + $0x8] sm:$0xff]
    %v104 = vld [vmem:[#allocation8] sm:$0xff]
    %v105 = vld [vmem:[#allocation8 + $0x8] sm:$0xff]
    %v106 = vld [vmem:[#allocation2] sm:$0xff]
    %v107 = vld [vmem:[#allocation2 + $0x8] sm:$0xff]
    %v108 = vld [vmem:[#allocation10] sm:$0xff]
    %v109 = vld [vmem:[#allocation10 + $0x8] sm:$0xff]
    %v110 = vld [vmem:[#allocation10 + $0x10] sm:$0xff]
    %v111 = vld [vmem:[#allocation10 + $0x18] sm:$0xff]
    %v112 = vld [vmem:[#allocation10 + $0x20] sm:$0xff]
    %v113 = vld [vmem:[#allocation10 + $0x28] sm:$0xff]
    %v114 = vld [vmem:[#allocation10 + $0x30] sm:$0xff]
    %v115 = vld [vmem:[#allocation10 + $0x38] sm:$0xff]
    %v116 = vld [vmem:[#allocation10 + $0x40] sm:$0xff]
    %v117 = vld [vmem:[#allocation10 + $0x48] sm:$0xff]
    %v118 = vld [vmem:[#allocation10 + $0x50] sm:$0xff]
    %v119 = vld [vmem:[#allocation10 + $0x58] sm:$0xff]
    %v120 = vld [vmem:[#allocation10 + $0x60] sm:$0xff]
    %v121 = vld [vmem:[#allocation10 + $0x68] sm:$0xff]
    %v122 = vld [vmem:[#allocation10 + $0x70] sm:$0xff]
    %v123 = vld [vmem:[#allocation10 + $0x78] sm:$0xff]
    %124 = vmatprep.subr.mxu0 0.0
    %125 = vmatpush1.msra.mxu0 %v108
    %126 = vmatprep.subr.mxu0 0.0
    %127 = vmatpush1.msra.mxu0 %v109
    %128 = vmatprep.subr.mxu0 0.0
    %129 = vmatpush1.msra.mxu0 %v110
    %130 = vmatprep.subr.mxu0 0.0
    %131 = vmatpush1.msra.mxu0 %v111
    %132 = vmatprep.subr.mxu0 0.0
    %133 = vmatpush1.msra.mxu0 %v112
    %134 = vmatprep.subr.mxu0 0.0
    %135 = vmatpush1.msra.mxu0 %v113
    %136 = vmatprep.subr.mxu0 0.0
    %137 = vmatpush1.msra.mxu0 %v114
    %138 = vmatprep.subr.mxu0 0.0
    %139 = vmatpush1.msra.mxu0 %v115
    %140 = vmatprep.subr.mxu0 0.0
    %141 = vmatpush1.msra.mxu0 %v116
    %142 = vmatprep.subr.mxu0 0.0
    %143 = vmatpush1.msra.mxu0 %v117
    %144 = vmatprep.subr.mxu0 0.0
    %145 = vmatpush1.msra.mxu0 %v118
    %146 = vmatprep.subr.mxu0 0.0
    %147 = vmatpush1.msra.mxu0 %v119
    %148 = vmatprep.subr.mxu0 0.0
    %149 = vmatpush1.msra.mxu0 %v120
    %150 = vmatprep.subr.mxu0 0.0
    %151 = vmatpush1.msra.mxu0 %v121
    %152 = vmatprep.subr.mxu0 0.0
    %153 = vmatpush1.msra.mxu0 %v122
    %154 = vmatprep.subr.mxu0 0.0
    %155 = vmatpush1.msra.mxu0 %v123
    %156 = vmatprep.subr.mxu0 0.0
    %157 = vmatpush1.msra.mxu0 0.0
    %158 = vmatprep.subr.mxu0 0.0
    %159 = vmatpush1.msra.mxu0 0.0
    %160 = vmatprep.subr.mxu0 0.0
    %161 = vmatpush1.msra.mxu0 0.0
    %162 = vmatprep.subr.mxu0 0.0
    %163 = vmatpush1.msra.mxu0 0.0
    %164 = vmatprep.subr.mxu0 0.0
    %165 = vmatpush1.msra.mxu0 0.0
    %166 = vmatprep.subr.mxu0 0.0
    %167 = vmatpush1.msra.mxu0 0.0
    %168 = vmatprep.subr.mxu0 0.0
    %169 = vmatpush1.msra.mxu0 0.0
    %170 = vmatprep.subr.mxu0 0.0
    %171 = vmatpush1.msra.mxu0 0.0
    %172 = vmatprep.subr.mxu0 0.0
    %173 = vmatpush1.msra.mxu0 0.0
    %174 = vmatprep.subr.mxu0 0.0
    %175 = vmatpush1.msra.mxu0 0.0
    %176 = vmatprep.subr.mxu0 0.0
    %177 = vmatpush1.msra.mxu0 0.0
    %178 = vmatprep.subr.mxu0 0.0
    %179 = vmatpush1.msra.mxu0 0.0
    %180 = vmatprep.subr.mxu0 0.0
    %181 = vmatpush1.msra.mxu0 0.0
    %182 = vmatprep.subr.mxu0 0.0
    %183 = vmatpush1.msra.mxu0 0.0
    %184 = vmatprep.subr.mxu0 0.0
    %185 = vmatpush1.msra.mxu0 0.0
    %186 = vmatprep.subr.mxu0 0.0
    %187 = vmatpush1.msra.mxu0 0.0
    %188 = vmatprep.mubr.f32.mxu0 0.0
    %189 = vmatmul.mubr.f32.gmra.mrb[0].mxu0 %v102
    %v190 = vpop.f32.mrb[0].mxu0
    %v191 = vadd.f32 0.0, %v190
    %v192 = vpop.f32.mrb[0].mxu0
    %193 = vmatprep.mubr.f32.mxu0 0.0
    %194 = vmatmul.mubr.f32.gmra.mrb[0].mxu0 %v103
    %v195 = vpop.f32.mrb[0].mxu0
    %v196 = vadd.f32 0.0, %v195
    %v197 = vpop.f32.mrb[0].mxu0
    %198 = vdwg.mxu0
    %v199 = vadd.f32 %v106, %v191
    %v200 = vadd.f32 %v107, %v196
    %201 = vst [vmem:[#allocation2] sm:$0xff] %v199
    %202 = vst [vmem:[#allocation2 + $0x8] sm:$0xff] %v200
    %v203 = vld [vmem:[#allocation3] sm:$0xff]
    %v204 = vld [vmem:[#allocation3 + $0x8] sm:$0xff]
    %v205 = vld [vmem:[#allocation11] sm:$0xff]
    %v206 = vld [vmem:[#allocation11 + $0x8] sm:$0xff]
    %v207 = vld [vmem:[#allocation11 + $0x10] sm:$0xff]
    %v208 = vld [vmem:[#allocation11 + $0x18] sm:$0xff]
    %v209 = vld [vmem:[#allocation11 + $0x20] sm:$0xff]
    %v210 = vld [vmem:[#allocation11 + $0x28] sm:$0xff]
    %v211 = vld [vmem:[#allocation11 + $0x30] sm:$0xff]
    %v212 = vld [vmem:[#allocation11 + $0x38] sm:$0xff]
    %v213 = vld [vmem:[#allocation11 + $0x40] sm:$0xff]
    %v214 = vld [vmem:[#allocation11 + $0x48] sm:$0xff]
    %v215 = vld [vmem:[#allocation11 + $0x50] sm:$0xff]
    %v216 = vld [vmem:[#allocation11 + $0x58] sm:$0xff]
    %v217 = vld [vmem:[#allocation11 + $0x60] sm:$0xff]
    %v218 = vld [vmem:[#allocation11 + $0x68] sm:$0xff]
    %v219 = vld [vmem:[#allocation11 + $0x70] sm:$0xff]
    %v220 = vld [vmem:[#allocation11 + $0x78] sm:$0xff]
    %221 = vmatprep.subr.mxu0 0.0
    %222 = vmatpush1.msra.mxu0 %v205
    %223 = vmatprep.subr.mxu0 0.0
    %224 = vmatpush1.msra.mxu0 %v206
    %225 = vmatprep.subr.mxu0 0.0
    %226 = vmatpush1.msra.mxu0 %v207
    %227 = vmatprep.subr.mxu0 0.0
    %228 = vmatpush1.msra.mxu0 %v208
    %229 = vmatprep.subr.mxu0 0.0
    %230 = vmatpush1.msra.mxu0 %v209
    %231 = vmatprep.subr.mxu0 0.0
    %232 = vmatpush1.msra.mxu0 %v210
    %233 = vmatprep.subr.mxu0 0.0
    %234 = vmatpush1.msra.mxu0 %v211
    %235 = vmatprep.subr.mxu0 0.0
    %236 = vmatpush1.msra.mxu0 %v212
    %237 = vmatprep.subr.mxu0 0.0
    %238 = vmatpush1.msra.mxu0 %v213
    %239 = vmatprep.subr.mxu0 0.0
    %240 = vmatpush1.msra.mxu0 %v214
    %241 = vmatprep.subr.mxu0 0.0
    %242 = vmatpush1.msra.mxu0 %v215
    %243 = vmatprep.subr.mxu0 0.0
    %244 = vmatpush1.msra.mxu0 %v216
    %245 = vmatprep.subr.mxu0 0.0
    %246 = vmatpush1.msra.mxu0 %v217
    %247 = vmatprep.subr.mxu0 0.0
    %248 = vmatpush1.msra.mxu0 %v218
    %249 = vmatprep.subr.mxu0 0.0
    %250 = vmatpush1.msra.mxu0 %v219
    %251 = vmatprep.subr.mxu0 0.0
    %252 = vmatpush1.msra.mxu0 %v220
    %253 = vmatprep.subr.mxu0 0.0
    %254 = vmatpush1.msra.mxu0 0.0
    %255 = vmatprep.subr.mxu0 0.0
    %256 = vmatpush1.msra.mxu0 0.0
    %257 = vmatprep.subr.mxu0 0.0
    %258 = vmatpush1.msra.mxu0 0.0
    %259 = vmatprep.subr.mxu0 0.0
    %260 = vmatpush1.msra.mxu0 0.0
    %261 = vmatprep.subr.mxu0 0.0
    %262 = vmatpush1.msra.mxu0 0.0
    %263 = vmatprep.subr.mxu0 0.0
    %264 = vmatpush1.msra.mxu0 0.0
    %265 = vmatprep.subr.mxu0 0.0
    %266 = vmatpush1.msra.mxu0 0.0
    %267 = vmatprep.subr.mxu0 0.0
    %268 = vmatpush1.msra.mxu0 0.0
    %269 = vmatprep.subr.mxu0 0.0
    %270 = vmatpush1.msra.mxu0 0.0
    %271 = vmatprep.subr.mxu0 0.0
    %272 = vmatpush1.msra.mxu0 0.0
    %273 = vmatprep.subr.mxu0 0.0
    %274 = vmatpush1.msra.mxu0 0.0
    %275 = vmatprep.subr.mxu0 0.0
    %276 = vmatpush1.msra.mxu0 0.0
    %277 = vmatprep.subr.mxu0 0.0
    %278 = vmatpush1.msra.mxu0 0.0
    %279 = vmatprep.subr.mxu0 0.0
    %280 = vmatpush1.msra.mxu0 0.0
    %281 = vmatprep.subr.mxu0 0.0
    %282 = vmatpush1.msra.mxu0 0.0
    %283 = vmatprep.subr.mxu0 0.0
    %284 = vmatpush1.msra.mxu0 0.0
    %285 = vmatprep.mubr.f32.mxu0 0.0
    %286 = vmatmul.mubr.f32.gmra.mrb[0].mxu0 %v104
    %v287 = vpop.f32.mrb[0].mxu0
    %v288 = vadd.f32 0.0, %v287
    %v289 = vpop.f32.mrb[0].mxu0
    %290 = vmatprep.mubr.f32.mxu0 0.0
    %291 = vmatmul.mubr.f32.gmra.mrb[0].mxu0 %v105
    %v292 = vpop.f32.mrb[0].mxu0
    %v293 = vadd.f32 0.0, %v292
    %v294 = vpop.f32.mrb[0].mxu0
    %295 = vdwg.mxu0
    %v296 = vadd.f32 %v203, %v288
    %v297 = vadd.f32 %v204, %v293
    %298 = vst [vmem:[#allocation3] sm:$0xff] %v296
    %299 = vst [vmem:[#allocation3 + $0x8] sm:$0xff] %v297
    %v300 = vld [vmem:[#allocation4] sm:$0xff]
    %v301 = vld [vmem:[#allocation4 + $0x8] sm:$0xff]
    %v302 = vadd.f32 %v102, %v104
    %v303 = vadd.f32 %v103, %v105
    %v304 = vld [vmem:[#allocation13] sm:$0xff]
    %v305 = vld [vmem:[#allocation13 + $0x8] sm:$0xff]
    %v306 = vld [vmem:[#allocation13 + $0x10] sm:$0xff]
    %v307 = vld [vmem:[#allocation13 + $0x18] sm:$0xff]
    %v308 = vld [vmem:[#allocation13 + $0x20] sm:$0xff]
    %v309 = vld [vmem:[#allocation13 + $0x28] sm:$0xff]
    %v310 = vld [vmem:[#allocation13 + $0x30] sm:$0xff]
    %v311 = vld [vmem:[#allocation13 + $0x38] sm:$0xff]
    %v312 = vld [vmem:[#allocation13 + $0x40] sm:$0xff]
    %v313 = vld [vmem:[#allocation13 + $0x48] sm:$0xff]
    %v314 = vld [vmem:[#allocation13 + $0x50] sm:$0xff]
    %v315 = vld [vmem:[#allocation13 + $0x58] sm:$0xff]
    %v316 = vld [vmem:[#allocation13 + $0x60] sm:$0xff]
    %v317 = vld [vmem:[#allocation13 + $0x68] sm:$0xff]
    %v318 = vld [vmem:[#allocation13 + $0x70] sm:$0xff]
    %v319 = vld [vmem:[#allocation13 + $0x78] sm:$0xff]
    %320 = vmatprep.subr.mxu0 0.0
    %321 = vmatpush1.msra.mxu0 %v304
    %322 = vmatprep.subr.mxu0 0.0
    %323 = vmatpush1.msra.mxu0 %v305
    %324 = vmatprep.subr.mxu0 0.0
    %325 = vmatpush1.msra.mxu0 %v306
    %326 = vmatprep.subr.mxu0 0.0
    %327 = vmatpush1.msra.mxu0 %v307
    %328 = vmatprep.subr.mxu0 0.0
    %329 = vmatpush1.msra.mxu0 %v308
    %330 = vmatprep.subr.mxu0 0.0
    %331 = vmatpush1.msra.mxu0 %v309
    %332 = vmatprep.subr.mxu0 0.0
    %333 = vmatpush1.msra.mxu0 %v310
    %334 = vmatprep.subr.mxu0 0.0
    %335 = vmatpush1.msra.mxu0 %v311
    %336 = vmatprep.subr.mxu0 0.0
    %337 = vmatpush1.msra.mxu0 %v312
    %338 = vmatprep.subr.mxu0 0.0
    %339 = vmatpush1.msra.mxu0 %v313
    %340 = vmatprep.subr.mxu0 0.0
    %341 = vmatpush1.msra.mxu0 %v314
    %342 = vmatprep.subr.mxu0 0.0
    %343 = vmatpush1.msra.mxu0 %v315
    %344 = vmatprep.subr.mxu0 0.0
    %345 = vmatpush1.msra.mxu0 %v316
    %346 = vmatprep.subr.mxu0 0.0
    %347 = vmatpush1.msra.mxu0 %v317
    %348 = vmatprep.subr.mxu0 0.0
    %349 = vmatpush1.msra.mxu0 %v318
    %350 = vmatprep.subr.mxu0 0.0
    %351 = vmatpush1.msra.mxu0 %v319
    %352 = vmatprep.subr.mxu0 0.0
    %353 = vmatpush1.msra.mxu0 0.0
    %354 = vmatprep.subr.mxu0 0.0
    %355 = vmatpush1.msra.mxu0 0.0
    %356 = vmatprep.subr.mxu0 0.0
    %357 = vmatpush1.msra.mxu0 0.0
    %358 = vmatprep.subr.mxu0 0.0
    %359 = vmatpush1.msra.mxu0 0.0
    %360 = vmatprep.subr.mxu0 0.0
    %361 = vmatpush1.msra.mxu0 0.0
    %362 = vmatprep.subr.mxu0 0.0
    %363 = vmatpush1.msra.mxu0 0.0
    %364 = vmatprep.subr.mxu0 0.0
    %365 = vmatpush1.msra.mxu0 0.0
    %366 = vmatprep.subr.mxu0 0.0
    %367 = vmatpush1.msra.mxu0 0.0
    %368 = vmatprep.subr.mxu0 0.0
    %369 = vmatpush1.msra.mxu0 0.0
    %370 = vmatprep.subr.mxu0 0.0
    %371 = vmatpush1.msra.mxu0 0.0
    %372 = vmatprep.subr.mxu0 0.0
    %373 = vmatpush1.msra.mxu0 0.0
    %374 = vmatprep.subr.mxu0 0.0
    %375 = vmatpush1.msra.mxu0 0.0
    %376 = vmatprep.subr.mxu0 0.0
    %377 = vmatpush1.msra.mxu0 0.0
    %378 = vmatprep.subr.mxu0 0.0
    %379 = vmatpush1.msra.mxu0 0.0
    %380 = vmatprep.subr.mxu0 0.0
    %381 = vmatpush1.msra.mxu0 0.0
    %382 = vmatprep.subr.mxu0 0.0
    %383 = vmatpush1.msra.mxu0 0.0
    %384 = vmatprep.mubr.f32.mxu0 0.0
    %385 = vmatmul.mubr.f32.gmra.mrb[0].mxu0 %v302
    %v386 = vpop.f32.mrb[0].mxu0
    %v387 = vadd.f32 0.0, %v386
    %v388 = vpop.f32.mrb[0].mxu0
    %389 = vmatprep.mubr.f32.mxu0 0.0
    %390 = vmatmul.mubr.f32.gmra.mrb[0].mxu0 %v303
    %v391 = vpop.f32.mrb[0].mxu0
    %v392 = vadd.f32 0.0, %v391
    %v393 = vpop.f32.mrb[0].mxu0
    %394 = vdwg.mxu0
    %v395 = vadd.f32 %v300, %v387
    %v396 = vadd.f32 %v301, %v392
    %397 = vst [vmem:[#allocation4] sm:$0xff] %v395
    %398 = vst [vmem:[#allocation4 + $0x8] sm:$0xff] %v396
    // Predicated region
    $region46: #{tpu_custom_call.1} parent=1 // pred_check
      %p399 = pneg %p92
    $region47: #{tpu_custom_call.1} parent=1 // pred_check_branch
      %401 = sbr.rel (%p399) target = $region49
    $region48: #{tpu_custom_call.1} parent=1 // pred_region
      %v402 = vld [vmem:[#allocation2] sm:$0xff]
      %v403 = vld [vmem:[#allocation2 + $0x8] sm:$0xff]
      %v404 = vld [vmem:[#allocation3] sm:$0xff]
      %v405 = vld [vmem:[#allocation3 + $0x8] sm:$0xff]
      %v406 = vld [vmem:[#allocation4] sm:$0xff]
      %v407 = vld [vmem:[#allocation4 + $0x8] sm:$0xff]
      %v408 = vsub.f32 %v402, %v404
      %v409 = vsub.f32 %v403, %v405
      %410 = vst [vmem:[#allocation14] sm:$0xff] %v408
      %411 = vst [vmem:[#allocation14 + $0x8] sm:$0xff] %v409
      %v412 = vsub.f32 %v406, %v404
      %v413 = vsub.f32 %v407, %v405
      %v414 = vsub.f32 %v412, %v402
      %v415 = vsub.f32 %v413, %v403
      %416 = vst [vmem:[#allocation15] sm:$0xff] %v414
      %417 = vst [vmem:[#allocation15 + $0x8] sm:$0xff] %v415
    $region49: #{tpu_custom_call.1} parent=1 // pred_fallthru
      _
    // Predicated region
    $region50: #{tpu_custom_call.1} parent=1 // pred_check
      _
    $region51: #{tpu_custom_call.1} parent=1 // pred_check_branch
      %419 = sbr.rel (0) target = $region53
    $region52: #{tpu_custom_call.1} parent=1 // pred_region
      %s421 = ssub.s32 256, 256
      %422 = vsyncadd [#allocation7], %s421
      %s423 = sshll.u32 [#allocation14], 4
      %s424 = int_to_ptr.vmem [resolvable:$true] %s423
      %429 = dma.vmem_to_hbm [thread:$0]  %s424, 256, %s5, [#allocation7], 128, 128, 8
    $region53: #{tpu_custom_call.1} parent=1 // pred_fallthru
      _
    // Predicated region
    $region54: #{tpu_custom_call.1} parent=1 // pred_check
      _
    $region55: #{tpu_custom_call.1} parent=1 // pred_check_branch
      %431 = sbr.rel (0) target = $region57
    $region56: #{tpu_custom_call.1} parent=1 // pred_region
      %s433 = ssub.s32 256, 256
      %434 = vsyncadd [#allocation16], %s433
      %s435 = sshll.u32 [#allocation15], 4
      %s436 = int_to_ptr.vmem [resolvable:$true] %s435
      %441 = dma.vmem_to_hbm [thread:$0]  %s436, 256, %s6, [#allocation16], 128, 128, 8
    $region57: #{tpu_custom_call.1} parent=1 // pred_fallthru
      _
    // Predicated region
    $region58: #{tpu_custom_call.1} parent=1 // pred_check
      _
    $region59: #{tpu_custom_call.1} parent=1 // pred_check_branch
      %443 = sbr.rel (0) target = $region61
    $region60: #{tpu_custom_call.1} parent=1 // pred_region
      %444 = dma.done [#allocation7], 256
    $region61: #{tpu_custom_call.1} parent=1 // pred_fallthru
      _
    // Predicated region
    $region62: #{tpu_custom_call.1} parent=1 // pred_check
      _
    $region63: #{tpu_custom_call.1} parent=1 // pred_check_branch
      %446 = sbr.rel (0) target = $region65
    $region64: #{tpu_custom_call.1} parent=1 // pred_region
      %447 = dma.done [#allocation16], 256
    $region65: #{tpu_custom_call.1} parent=1 // pred_fallthru
      _
    %448 = vsyncpa [#allocation6], 1
    %449 = vsyncpa [#allocation9], 1
    %450 = vsyncpa [#allocation12], 1
    %451 = vsyncpa [#allocation7], 1
    %452 = vsyncpa [#allocation16], 1

</llo_original>
